<compile_context>
chip_gen: v7x
topology: tpu7x:2x2x1
jax: 0.10.0
libtpu: 0.0.40
codegen_flags: <defaults>
</compile_context>

<pallas_src>
import functools
import math

import numpy as np
import jax
import jax.numpy as jnp
from jax.experimental import pallas as pl
from jax.experimental.pallas import tpu as pltpu


# 2*pi split into a part exact in f32 (402/64, so k*HI stays exact for the
# small integer quotients produced by DDPM-scale arguments) + a correction.
_TWO_PI = 2.0 * math.pi
_TWO_PI_HI = 6.28125                   # 402 / 64, exact in float32
_TWO_PI_LO = _TWO_PI - _TWO_PI_HI      # ~1.9353e-3
_INV_TWO_PI = 1.0 / _TWO_PI


def _fit_sin_coeffs(n_terms=7):
    """Odd polynomial sin(x) ~= sum_k c_k x^(2k+1) on [-pi, pi] (f64 LSQ fit)."""
    # Fit in the normalized variable u = x/pi for conditioning, then rescale.
    u = np.linspace(0.0, 1.0, 4097, dtype=np.float64)
    basis = np.stack([u ** (2 * k + 1) for k in range(n_terms)], axis=1)
    c, *_ = np.linalg.lstsq(basis, np.sin(np.pi * u), rcond=None)
    coeffs = c / np.array([np.pi ** (2 * k + 1) for k in range(n_terms)])
    # Sanity: polynomial error is orders of magnitude below the intrinsic f32
    # argument-rounding noise (~1e-4 at ~1000 rad arguments).
    x = np.linspace(-np.pi, np.pi, 20001)
    approx = sum(coeffs[k] * x ** (2 * k + 1) for k in range(n_terms))
    assert np.max(np.abs(approx - np.sin(x))) < 1e-6
    return tuple(float(v) for v in coeffs)


_SIN_COEFFS = _fit_sin_coeffs()        # degree-13 odd polynomial, 7 coefficients


def _sinusoidal_embed_kernel(t_ref, tab_ref, o_ref):
    # t_ref: (TB, 1) f32; tab_ref: (2, dim) f32 [row 0 = freqs, row 1 = phase];
    # o_ref: (TB, dim).
    freq = tab_ref[0:1, :]
    phase = tab_ref[1:2, :]
    # Fold the cos-half phase (pi/2) in BEFORE the range reduction so the
    # reduced argument lands in [-pi, pi] for the narrow-range polynomial.
    emb = t_ref[...] * freq + phase                       # (TB, dim), VPU
    # Cody-Waite range reduction: emb = 2*pi*k + r, |r| <= pi (+ rounding).
    k = jnp.floor(emb * _INV_TWO_PI + 0.5)
    r = (emb - k * _TWO_PI_HI) - k * _TWO_PI_LO
    # Short odd polynomial for sin on the reduced range (Horner on r^2).
    r2 = r * r
    p = _SIN_COEFFS[-1]
    for c in _SIN_COEFFS[-2::-1]:
        p = p * r2 + c
    o_ref[...] = (r * p).astype(o_ref.dtype)              # one unmasked full-width store


def _round_up(x, m):
    return ((x + m - 1) // m) * m


@functools.lru_cache(maxsize=None)
def _freq_phase_table(dim):
    """(2, dim) f32 device constant: row 0 = full-width freqs, row 1 = phase."""
    half = dim // 2
    scale = math.log(10000.0) / (half - 1)
    freqs_half = np.exp(np.arange(half, dtype=np.float64) * -scale)
    freqs = np.concatenate([freqs_half, freqs_half])
    phase = np.concatenate([np.zeros(half), np.full(half, 0.5 * np.pi)])
    return jnp.asarray(np.stack([freqs, phase]).astype(np.float32))


def _choose_block_b(B, dim):
    # ~4 MiB f32 output tile cap (double-buffered -> safe on v5e's 16 MiB and
    # v6e/v7x's 32 MiB default scoped VMEM).
    max_rows = max(8, ((1 << 20) // dim) // 8 * 8)
    if B * dim * 4 > (2 << 20):
        # Large problem: force >= 2 grid steps so both v7x TensorCores get work
        # under dimension_semantics=("parallel",).
        max_rows = min(max_rows, max(8, _round_up(pl.cdiv(B, 2), 8)))
    if B <= max_rows:
        return B
    # Prefer a multiple-of-8 block that divides B exactly (no ragged / masked
    # final store).
    for cand in range(max_rows, 7, -8):
        if B % cand == 0:
            return cand
    return max_rows


def sinusoidal_timestep_embed(timesteps, dim, *, block_b=None,
                              out_dtype=jnp.float32):
    """timesteps: (B,) int/float array -> (B, dim) sinusoidal embedding."""
    assert dim % 2 == 0 and dim >= 4, "dim must be even and >= 4"
    B = timesteps.shape[0]
    if block_b is None:
        block_b = _choose_block_b(B, dim)

    t2d = timesteps.astype(jnp.float32).reshape(B, 1)
    tab = _freq_phase_table(dim)

    return pl.pallas_call(
        _sinusoidal_embed_kernel,
        out_shape=jax.ShapeDtypeStruct((B, dim), out_dtype),
        grid=(pl.cdiv(B, block_b),),
        in_specs=[
            pl.BlockSpec((block_b, 1), lambda i: (i, 0)),   # timestep column
            pl.BlockSpec((2, dim), lambda i: (0, 0)),       # fused freq/phase table
        ],
        out_specs=pl.BlockSpec((block_b, dim), lambda i: (i, 0)),
        compiler_params=pltpu.CompilerParams(
            dimension_semantics=("parallel",)),
    )(t2d, tab)


def _reference(timesteps, dim):
    """float64 numpy reference matching the PyTorch module."""
    t = np.asarray(timesteps, dtype=np.float64)
    half = dim // 2
    scale = math.log(10000.0) / (half - 1)
    freqs = np.exp(np.arange(half, dtype=np.float64) * -scale)
    emb = t[:, None] * freqs[None, :]
    return np.concatenate([np.sin(emb), np.cos(emb)], axis=1)


if __name__ == "__main__":
    key = jax.random.PRNGKey(0)
    # single-block case + a multi-step gridded case
    for B, dim, block_b in [(8, 128, None), (64, 128, 16)]:
        key, sub = jax.random.split(key)
        # diffusion-style integer timesteps in [0, 1000)
        timesteps = jax.random.randint(sub, (B,), minval=0, maxval=1000,
                                       dtype=jnp.int32)

        out = jax.block_until_ready(
            sinusoidal_timestep_embed(timesteps, dim, block_b=block_b))
        assert out.shape == (B, dim)
        assert out.dtype == jnp.float32

        ref = _reference(np.asarray(timesteps), dim)
        # f32 arguments reach ~1000 rad, so the evaluation intrinsically
        # carries ~1e-4-level error vs the f64 reference; 2e-3 = ~10x margin.
        err = np.max(np.abs(np.asarray(out, dtype=np.float64) - ref))
        assert err < 2e-3, f"max abs error {err} for B={B}, dim={dim}"

    print("KERNEL_OK")
</pallas_src>

<mosaic_0001>
module attributes {stable_mosaic.version = 11 : i64} {
  func.func @_sinusoidal_embed_kernel(%arg0: i32, %arg1: memref<8x1xf32, #tpu.memory_space<vmem>>, %arg2: memref<2x128xf32, #tpu.memory_space<vmem>>, %arg3: memref<8x128xf32, #tpu.memory_space<vmem>>) attributes {dimension_semantics = [#tpu.dimension_semantics<parallel>], iteration_bounds = array<i64: 1>, scalar_prefetch = 0 : i64, scratch_operands = 0 : i64, tpu.core_type = #tpu.core_type<tc>, window_params = [{transform_indices = @transform_0, window_bounds = array<i64: 8, 1>}, {pipeline_mode = #tpu.pipeline_mode<synchronous>, transform_indices = @transform_1, window_bounds = array<i64: 2, 128>}, {transform_indices = @transform_2, window_bounds = array<i64: 8, 128>}]} {
    %c0 = arith.constant 0 : index
    %c0_0 = arith.constant 0 : index
    %0 = vector.load %arg2[%c0, %c0_0] : memref<2x128xf32, #tpu.memory_space<vmem>>, vector<1x128xf32>
    %c1 = arith.constant 1 : index
    %c0_1 = arith.constant 0 : index
    %1 = vector.load %arg2[%c1, %c0_1] : memref<2x128xf32, #tpu.memory_space<vmem>>, vector<1x128xf32>
    %c0_2 = arith.constant 0 : index
    %c0_3 = arith.constant 0 : index
    %2 = vector.load %arg1[%c0_2, %c0_3] : memref<8x1xf32, #tpu.memory_space<vmem>>, vector<8x1xf32>
    %3 = vector.broadcast %2 : vector<8x1xf32> to vector<8x128xf32>
    %4 = vector.broadcast %0 : vector<1x128xf32> to vector<8x128xf32>
    %5 = arith.mulf %3, %4 : vector<8x128xf32>
    %6 = vector.broadcast %1 : vector<1x128xf32> to vector<8x128xf32>
    %7 = arith.addf %5, %6 : vector<8x128xf32>
    %cst = arith.constant 0.159154937 : f32
    %8 = vector.broadcast %cst : f32 to vector<8x128xf32>
    %9 = arith.mulf %7, %8 : vector<8x128xf32>
    %cst_4 = arith.constant 5.000000e-01 : f32
    %10 = vector.broadcast %cst_4 : f32 to vector<8x128xf32>
    %11 = arith.addf %9, %10 : vector<8x128xf32>
    %12 = math.floor %11 : vector<8x128xf32>
    %cst_5 = arith.constant 6.281250e+00 : f32
    %13 = vector.broadcast %cst_5 : f32 to vector<8x128xf32>
    %14 = arith.mulf %12, %13 : vector<8x128xf32>
    %15 = arith.subf %7, %14 : vector<8x128xf32>
    %cst_6 = arith.constant 0.00193530717 : f32
    %16 = vector.broadcast %cst_6 : f32 to vector<8x128xf32>
    %17 = arith.mulf %12, %16 : vector<8x128xf32>
    %18 = arith.subf %15, %17 : vector<8x128xf32>
    %19 = arith.mulf %18, %18 : vector<8x128xf32>
    %cst_7 = arith.constant 1.35328165E-10 : f32
    %20 = vector.broadcast %cst_7 : f32 to vector<8x128xf32>
    %21 = arith.mulf %20, %19 : vector<8x128xf32>
    %cst_8 = arith.constant -2.47014817E-8 : f32
    %22 = vector.broadcast %cst_8 : f32 to vector<8x128xf32>
    %23 = arith.addf %21, %22 : vector<8x128xf32>
    %24 = arith.mulf %23, %19 : vector<8x128xf32>
    %cst_9 = arith.constant 2.75322782E-6 : f32
    %25 = vector.broadcast %cst_9 : f32 to vector<8x128xf32>
    %26 = arith.addf %24, %25 : vector<8x128xf32>
    %27 = arith.mulf %26, %19 : vector<8x128xf32>
    %cst_10 = arith.constant -1.98403097E-4 : f32
    %28 = vector.broadcast %cst_10 : f32 to vector<8x128xf32>
    %29 = arith.addf %27, %28 : vector<8x128xf32>
    %30 = arith.mulf %29, %19 : vector<8x128xf32>
    %cst_11 = arith.constant 0.00833331421 : f32
    %31 = vector.broadcast %cst_11 : f32 to vector<8x128xf32>
    %32 = arith.addf %30, %31 : vector<8x128xf32>
    %33 = arith.mulf %32, %19 : vector<8x128xf32>
    %cst_12 = arith.constant -0.166666657 : f32
    %34 = vector.broadcast %cst_12 : f32 to vector<8x128xf32>
    %35 = arith.addf %33, %34 : vector<8x128xf32>
    %36 = arith.mulf %35, %19 : vector<8x128xf32>
    %cst_13 = arith.constant 1.000000e+00 : f32
    %37 = vector.broadcast %cst_13 : f32 to vector<8x128xf32>
    %38 = arith.addf %36, %37 : vector<8x128xf32>
    %39 = arith.mulf %18, %38 : vector<8x128xf32>
    %c0_14 = arith.constant 0 : index
    %c0_15 = arith.constant 0 : index
    %40 = vector.load %arg3[%c0_14, %c0_15] : memref<8x128xf32, #tpu.memory_space<vmem>>, vector<8x128xf32>
    tpu.vector_store %arg3[%c0_14, %c0_15], %39 {strides = array<i32>} : memref<8x128xf32, #tpu.memory_space<vmem>>, vector<8x128xf32>,
    return
  }
  func.func @transform_0(%arg0: i32) -> (i32, i32) {
    %c0_i32 = arith.constant 0 : i32
    %c0_i32_0 = arith.constant 0 : i32
    return %arg0, %c0_i32 : i32, i32
  }
  func.func @transform_1(%arg0: i32) -> (i32, i32) {
    %c0_i32 = arith.constant 0 : i32
    %c0_i32_0 = arith.constant 0 : i32
    %c0_i32_1 = arith.constant 0 : i32
    return %c0_i32, %c0_i32_0 : i32, i32
  }
  func.func @transform_2(%arg0: i32) -> (i32, i32) {
    %c0_i32 = arith.constant 0 : i32
    %c0_i32_0 = arith.constant 0 : i32
    return %arg0, %c0_i32 : i32, i32
  }
}

</mosaic_0001>

<llo_original>
// kernel: tpu_custom_call.1
$region0: #{tpu_custom_call.1}
  #allocation0 [shape = 'u32[]', space=smem, size = 0x4, offset = 0x4, fixed_abs, tag = 'smem constant byte address 0x4 - core index']
  #allocation1 [shape = 'u32[144,128]{1,0:T(1,128)}', space=vmem, size = 0x12000, scoped, tag = 'internal scratch']
  %s0 = inlined_call_operand.vmem [shape: f32[8,1], index: 0, kind: input, shape index: {}]
  %s1 = inlined_call_operand.vmem [shape: f32[2,128], index: 1, kind: input, shape index: {}]
  %s2 = inlined_call_operand.hbm [shape: f32[8,128], index: 2, kind: output, shape index: {}]
  %s3 = sld [smem:[#allocation0]]
  $region18: #{tpu_custom_call.1} parent=0
    _
  %s5 = ssub.s32 1, %s3
  %s6 = scalar_select 0, %s5, %s3
  $region1: #{tpu_custom_call.1} parent=0
    #allocation2 [shape = 'u8[4096]{0}', space=vmem, size = 0x1000, scoped, tag = 'output window, operand 0, single buffered']
    #allocation3 [shape = 's32[1]{0}', space=sflag, size = 0x4, scoped, tag = 'scoped memory for tpu_custom_call.1']
    %7 = vsyncpa [#allocation3], 0
    // Predicated region
    $region2: #{tpu_custom_call.1} parent=1 // pred_check
      _
    $region3: #{tpu_custom_call.1} parent=1 // pred_check_branch
      %9 = sbr.rel (0) target = $region5
    $region4: #{tpu_custom_call.1} parent=1 // pred_region
      _
    $region5: #{tpu_custom_call.1} parent=1 // pred_fallthru
      _
    // Predicated region
    $region6: #{tpu_custom_call.1} parent=1 // pred_check
      _
    $region7: #{tpu_custom_call.1} parent=1 // pred_check_branch
      %11 = sbr.rel (0) target = $region9
    $region8: #{tpu_custom_call.1} parent=1 // pred_region
      _
    $region9: #{tpu_custom_call.1} parent=1 // pred_fallthru
      _
    %v12 = vld [vmem:[%s1] sm:$0x1]
    %v13 = vld [vmem:[%s1 + $0x1] sm:$0x1]
    %v14 = vld [vmem:[%s0] sm:$0xff]
    %16 = vset.pattern.permute.xlu0 0
    %17 = vperm.xlu0 %16, %v14
    %v18 = vpop.permute.xlu0 %17
    %v20 = vlaneseq
    %v21 = vshrl.u32 %v20, 7
    %v22 = vsub.s32 0, %v21
    %v23 = vrot.slane %v12, %v22
    %v24 = vmul.f32 %v18, %v23
    %v25 = vlaneseq
    %v26 = vshrl.u32 %v25, 7
    %v27 = vsub.s32 0, %v26
    %v28 = vrot.slane %v13, %v27
    %v29 = vadd.f32 %v24, %v28
    %v30 = vmul.f32 %v29, 0.15915494
    %v31 = vadd.f32 %v30, 0.5
    %v32 = vfloor.f32 %v31
    %v33 = vmul.f32 %v32, 6.28125
    %v34 = vsub.f32 %v29, %v33
    %v35 = vmul.f32 %v32, 0.0019353072
    %v36 = vsub.f32 %v34, %v35
    %v37 = vmul.f32 %v36, %v36
    %v38 = vmul.f32 %v37, 1.3532817e-10
    %v39 = vadd.f32 %v38, -2.4701482e-08
    %v40 = vmul.f32 %v39, %v37
    %v41 = vadd.f32 %v40, 2.7532278e-06
    %v42 = vmul.f32 %v41, %v37
    %v43 = vadd.f32 %v42, -0.0001984031
    %v44 = vmul.f32 %v43, %v37
    %v45 = vadd.f32 %v44, 0.008333314
    %v46 = vmul.f32 %v45, %v37
    %v47 = vadd.f32 %v46, -0.16666666
    %v48 = vmul.f32 %v47, %v37
    %v49 = vadd.f32 %v48, 1.0
    %v50 = vmul.f32 %v36, %v49
    %51 = vst [vmem:[#allocation2] sm:$0xff] %v50
    // Predicated region
    $region10: #{tpu_custom_call.1} parent=1 // pred_check
      _
    $region11: #{tpu_custom_call.1} parent=1 // pred_check_branch
      %53 = sbr.rel (0) target = $region13
    $region12: #{tpu_custom_call.1} parent=1 // pred_region
      %s55 = ssub.s32 128, 128
      %56 = vsyncadd [#allocation3], %s55
      %s58 = sshll.u32 [#allocation2], 4
      %s59 = int_to_ptr.vmem [resolvable:$true] %s58
      %61 = dma.vmem_to_hbm [thread:$0]  %s59, 128, %s2, [#allocation3]
    $region13: #{tpu_custom_call.1} parent=1 // pred_fallthru
      _
    // Predicated region
    $region14: #{tpu_custom_call.1} parent=1 // pred_check
      _
    $region15: #{tpu_custom_call.1} parent=1 // pred_check_branch
      %63 = sbr.rel (0) target = $region17
    $region16: #{tpu_custom_call.1} parent=1 // pred_region
      %64 = dma.done [#allocation3], 128
    $region17: #{tpu_custom_call.1} parent=1 // pred_fallthru
      _
    %65 = vsyncpa [#allocation3], 1

</llo_original>
